<compile_context>
chip_gen: v5e
topology: v5e:2x2
jax: 0.10.0
libtpu: 0.0.40
codegen_flags: <defaults>
</compile_context>

<pallas_src>
import functools
import math

import jax
import jax.numpy as jnp
from jax import lax
from jax.experimental import pallas as pl
from jax.experimental.pallas import tpu as pltpu

LANE = 128


def _round_up(x, m):
    return (x + m - 1) // m * m


def _nbytes(a):
    return int(a.size) * jnp.dtype(a.dtype).itemsize


# --------------------------------------------------------------------------
# Kernel
# --------------------------------------------------------------------------
def _net_kernel(n_fc, x_ref, w_in_ref, b_in_ref, *rest):
    if n_fc > 0:
        w_fc_ref, b_fc_ref, w_out_ref, b_out_ref, o_ref = rest
    else:
        w_fc_ref = b_fc_ref = None
        w_out_ref, b_out_ref, o_ref = rest

    mxu_dtype = w_in_ref.dtype  # bf16 weights -> bf16 MXU inputs, f32 accumulate

    # Input layer: linear, no activation (matches Net.forward). Weights are
    # pre-transposed to [in, out] so there is no in-kernel relayout.
    h = jnp.dot(x_ref[...].astype(mxu_dtype), w_in_ref[...],
                preferred_element_type=jnp.float32) + b_in_ref[...]

    def hidden(hh, w, b):
        z = jnp.dot(hh.astype(mxu_dtype), w,
                    preferred_element_type=jnp.float32) + b
        return jnp.maximum(z, 0.0)

    if n_fc > 0:
        if n_fc <= 8:
            # Small layer counts: static unroll (serially dependent anyway).
            for i in range(n_fc):
                h = hidden(h, w_fc_ref[i], b_fc_ref[i])
        else:
            # Deep nets: keep code size / vreg pressure flat.
            h = lax.fori_loop(
                0, n_fc, lambda i, hh: hidden(hh, w_fc_ref[i], b_fc_ref[i]), h)

    # Output layer (n_pad -> 1): VPU multiply + lane reduction; zero padding of
    # the weight row makes the reduction exact. Narrow (tile_b, 1) store ->
    # HBM writeback is 4 bytes/row instead of 512.
    y = jnp.sum(h * w_out_ref[...], axis=-1, keepdims=True) + b_out_ref[...]
    o_ref[...] = y.astype(o_ref.dtype)


# --------------------------------------------------------------------------
# One-time parameter preparation (hoisted out of the per-call hot path)
# --------------------------------------------------------------------------
def _pad_weight_T(w, in_pad, out_pad):
    """PyTorch [out, in] weight -> transposed & zero-padded [in_pad, out_pad]."""
    wt = jnp.asarray(w, jnp.float32).T
    return jnp.zeros((in_pad, out_pad), jnp.float32).at[
        : wt.shape[0], : wt.shape[1]].set(wt)


def _pad_bias(b, out_pad):
    b = jnp.asarray(b, jnp.float32).reshape(-1)
    return jnp.zeros((1, out_pad), jnp.float32).at[0, : b.shape[0]].set(b)


def prepare_net_params(params, *, mxu_dtype=jnp.bfloat16):
    """Transpose / pad / stack PyTorch-layout params ONCE for the kernel.

    params = [w_in, b_in, w_fc0, b_fc0, ..., w_out, b_out] with weights
    [out, in] and biases [out]. Matmul weights are stored in `mxu_dtype`
    (bf16 by default) for native MXU throughput; biases and the tiny output
    row stay f32.
    """
    w_in, b_in = params[0], params[1]
    w_out, b_out = params[-2], params[-1]
    fc = params[2:-2]
    n_fc = len(fc) // 2

    n_inputs = int(w_in.shape[1])
    n_nodes = int(w_in.shape[0])
    n_pad = _round_up(n_nodes, LANE)

    # Input-layer weight: contraction dim stays at n_inputs (x is not lane
    # padded in HBM); output dim padded to 128 lanes.
    w_in_p = _pad_weight_T(w_in, n_inputs, n_pad).astype(mxu_dtype)
    b_in_p = _pad_bias(b_in, n_pad)

    if n_fc > 0:
        w_fc_p = jnp.stack([_pad_weight_T(fc[2 * i], n_pad, n_pad)
                            for i in range(n_fc)]).astype(mxu_dtype)
        b_fc_p = jnp.stack([_pad_bias(fc[2 * i + 1], n_pad)
                            for i in range(n_fc)])
    else:
        w_fc_p = b_fc_p = None

    w_out_row = _pad_bias(jnp.asarray(w_out, jnp.float32).reshape(-1), n_pad)
    b_out_p = jnp.asarray(b_out, jnp.float32).reshape(1, 1)

    return dict(n_fc=n_fc, n_inputs=n_inputs, n_nodes=n_nodes, n_pad=n_pad,
                w_in=w_in_p, b_in=b_in_p, w_fc=w_fc_p, b_fc=b_fc_p,
                w_out=w_out_row, b_out=b_out_p)


# --------------------------------------------------------------------------
# Forward wrapper
# --------------------------------------------------------------------------
def net_forward(x, prep, *, max_tile_b=1024, vmem_budget=40 * 1024 * 1024):
    """Forward pass using pre-prepared params (see prepare_net_params)."""
    B, n_inputs = x.shape
    n_fc, n_pad = prep["n_fc"], prep["n_pad"]
    assert n_inputs == prep["n_inputs"], "x feature dim mismatch"

    # ---- batch tile sizing ------------------------------------------------
    tile_b = min(max_tile_b, _round_up(B, 8))
    # v7x megacore: give the "parallel" batch axis >=2 grid steps when the
    # batch is big enough to split, so both TensorCores get work.
    if B >= 256 and _round_up(B, tile_b) // tile_b < 2:
        tile_b = _round_up(-(-B // 2), 8)

    # Explicit VMEM budget: double-buffered x / out tiles + resident weights.
    w_bytes = sum(_nbytes(prep[k]) for k in ("w_in", "b_in", "w_out", "b_out"))
    if n_fc > 0:
        w_bytes += _nbytes(prep["w_fc"]) + _nbytes(prep["b_fc"])
    per_row_bytes = 2 * n_inputs * 4 + 2 * LANE * 4   # x tile + lane-padded out tile
    avail = vmem_budget - w_bytes - (2 << 20)          # 2 MiB headroom
    vmem_cap = max(8, (avail // per_row_bytes) // 8 * 8)
    tile_b = max(8, min(tile_b, vmem_cap))

    b_pad = _round_up(B, tile_b)
    x = jnp.asarray(x, jnp.float32)
    if b_pad != B:   # only pad the batch when actually required
        x = jnp.zeros((b_pad, n_inputs), jnp.float32).at[:B].set(x)

    grid = (b_pad // tile_b,)

    resident = [prep["w_in"], prep["b_in"]]
    if n_fc > 0:
        resident += [prep["w_fc"], prep["b_fc"]]
    resident += [prep["w_out"], prep["b_out"]]

    def run(single_buffer):
        pm = pl.Buffered(buffer_count=1) if single_buffer else None
        in_specs = [pl.BlockSpec((tile_b, n_inputs), lambda i: (i, 0))]  # x: pipelined
        for a in resident:  # resident blocks: constant index_map
            nd = a.ndim
            in_specs.append(
                pl.BlockSpec(a.shape, lambda i, nd=nd: (0,) * nd, pipeline_mode=pm))
        return pl.pallas_call(
            functools.partial(_net_kernel, n_fc),
            out_shape=jax.ShapeDtypeStruct((b_pad, 1), jnp.float32),
            grid=grid,
            in_specs=in_specs,
            out_specs=pl.BlockSpec((tile_b, 1), lambda i: (i, 0)),
            compiler_params=pltpu.CompilerParams(
                dimension_semantics=("parallel",),
                vmem_limit_bytes=int(vmem_budget)),
        )(x, *resident)

    try:
        out = run(single_buffer=True)
    except Exception:
        # TODO(synk): drop this fallback once pl.Buffered(1) resident specs are
        # guaranteed by the deployed jax version; correctness is identical.
        out = run(single_buffer=False)

    return out if b_pad == B else out[:B]


# --------------------------------------------------------------------------
# Param init mirroring PyTorch defaults + pure-JAX reference
# --------------------------------------------------------------------------
def init_linear(key, in_features, out_features):
    """kaiming_uniform_(a=sqrt(5)) -> U(-1/sqrt(fan_in), 1/sqrt(fan_in))."""
    kw, kb = jax.random.split(key)
    bound = 1.0 / math.sqrt(in_features)
    w = jax.random.uniform(kw, (out_features, in_features),
                           minval=-bound, maxval=bound, dtype=jnp.float32)
    b = jax.random.uniform(kb, (out_features,),
                           minval=-bound, maxval=bound, dtype=jnp.float32)
    return w, b


def make_net_params(key, n_inputs, n_hidden_layers, n_nodes):
    keys = jax.random.split(key, n_hidden_layers + 1)
    params = []
    w, b = init_linear(keys[0], n_inputs, n_nodes)          # in_layer (MyLinear)
    params += [w, b]
    for i in range(n_hidden_layers - 1):                     # fcs
        w, b = init_linear(keys[1 + i], n_nodes, n_nodes)
        params += [w, b]
    w, b = init_linear(keys[-1], n_nodes, 1)                 # out_layer
    params += [w, b]
    return params


def net_forward_ref(x, params, mxu_dtype=None):
    """Pure-JAX reference (F.linear semantics). If mxu_dtype is set, emulates
    the kernel's low-precision MXU inputs with f32 accumulation."""
    def dot(a, w_t):
        if mxu_dtype is not None:
            a, w_t = a.astype(mxu_dtype), w_t.astype(mxu_dtype)
        return jnp.dot(a, w_t, preferred_element_type=jnp.float32)

    n_fc = (len(params) - 4) // 2
    w_in, b_in = params[0], params[1]
    h = dot(jnp.asarray(x, jnp.float32), jnp.asarray(w_in, jnp.float32).T) + b_in
    for i in range(n_fc):
        w, b = params[2 + 2 * i], params[3 + 2 * i]
        h = jnp.maximum(dot(h, jnp.asarray(w, jnp.float32).T) + b, 0.0)
    w_out, b_out = params[-2], params[-1]
    return h @ jnp.asarray(w_out, jnp.float32).T + b_out     # out layer stays f32


if __name__ == "__main__":
    # Net(n_inputs=32, n_hidden_layers=3, n_nodes=32, activation='relu'), batch=8.
    B, n_inputs, n_hidden_layers, n_nodes = 8, 32, 3, 32

    key = jax.random.PRNGKey(0)
    kx, kp = jax.random.split(key)
    x = jax.random.normal(kx, (B, n_inputs), dtype=jnp.float32)
    params = make_net_params(kp, n_inputs, n_hidden_layers, n_nodes)

    # Model-setup time: prepare (transpose/pad/stack/bf16-cast) params ONCE.
    prep = prepare_net_params(params)

    out = net_forward(x, prep)
    out = jax.block_until_ready(out)
    assert out.shape == (B, 1), out.shape

    # Tight check vs a reference that emulates the kernel's bf16-in / f32-acc math.
    ref_bf16 = net_forward_ref(x, params, mxu_dtype=jnp.bfloat16)
    assert jnp.allclose(out, ref_bf16, atol=1e-3, rtol=1e-3), (
        "Pallas kernel mismatch vs bf16-emulated JAX reference")
    # Looser sanity check vs the pure-f32 reference (bf16 MXU inputs => relaxed tol).
    ref_f32 = net_forward_ref(x, params)
    assert jnp.allclose(out, ref_f32, atol=2e-2, rtol=2e-2), (
        "Pallas kernel mismatch vs f32 JAX reference")

    print("KERNEL_OK")
</pallas_src>

<mosaic_0001>
module attributes {stable_mosaic.version = 11 : i64} {
  func.func @_net_kernel(%arg0: i32, %arg1: memref<8x32xf32, #tpu.memory_space<vmem>>, %arg2: memref<32x128xbf16, #tpu.memory_space<vmem>>, %arg3: memref<1x128xf32, #tpu.memory_space<vmem>>, %arg4: memref<2x128x128xbf16, #tpu.memory_space<vmem>>, %arg5: memref<2x1x128xf32, #tpu.memory_space<vmem>>, %arg6: memref<1x128xf32, #tpu.memory_space<vmem>>, %arg7: memref<1x1xf32, #tpu.memory_space<vmem>>, %arg8: memref<8x1xf32, #tpu.memory_space<vmem>>) attributes {dimension_semantics = [#tpu.dimension_semantics<parallel>], iteration_bounds = array<i64: 1>, scalar_prefetch = 0 : i64, scratch_operands = 0 : i64, tpu.core_type = #tpu.core_type<tc>, window_params = [{transform_indices = @transform_0, window_bounds = array<i64: 8, 32>}, {pipeline_mode = #tpu.pipeline_mode<synchronous>, transform_indices = @transform_1, window_bounds = array<i64: 32, 128>}, {pipeline_mode = #tpu.pipeline_mode<synchronous>, transform_indices = @transform_2, window_bounds = array<i64: 1, 128>}, {pipeline_mode = #tpu.pipeline_mode<synchronous>, transform_indices = @transform_3, window_bounds = array<i64: 2, 128, 128>}, {pipeline_mode = #tpu.pipeline_mode<synchronous>, transform_indices = @transform_4, window_bounds = array<i64: 2, 1, 128>}, {pipeline_mode = #tpu.pipeline_mode<synchronous>, transform_indices = @transform_5, window_bounds = array<i64: 1, 128>}, {pipeline_mode = #tpu.pipeline_mode<synchronous>, transform_indices = @transform_6, window_bounds = array<i64: 1, 1>}, {transform_indices = @transform_7, window_bounds = array<i64: 8, 1>}]} {
    %c0 = arith.constant 0 : index
    %c0_0 = arith.constant 0 : index
    %0 = vector.load %arg1[%c0, %c0_0] : memref<8x32xf32, #tpu.memory_space<vmem>>, vector<8x32xf32>
    %1 = arith.truncf %0 : vector<8x32xf32> to vector<8x32xbf16>
    %c0_1 = arith.constant 0 : index
    %c0_2 = arith.constant 0 : index
    %2 = vector.load %arg2[%c0_1, %c0_2] : memref<32x128xbf16, #tpu.memory_space<vmem>>, vector<32x128xbf16>
    %cst = arith.constant dense<0.000000e+00> : vector<8x128xf32>
    %3 = tpu.matmul %1, %2, %cst {dimension_numbers = #tpu.dot_dimension_numbers<[1], [0], [0], [1], [0, 0, 1, 1], [], []>} : vector<8x32xbf16>, vector<32x128xbf16>, vector<8x128xf32> -> vector<8x128xf32>
    %c0_3 = arith.constant 0 : index
    %c0_4 = arith.constant 0 : index
    %4 = vector.load %arg3[%c0_3, %c0_4] : memref<1x128xf32, #tpu.memory_space<vmem>>, vector<1x128xf32>
    %5 = vector.broadcast %4 : vector<1x128xf32> to vector<8x128xf32>
    %6 = arith.addf %3, %5 : vector<8x128xf32>
    %c0_5 = arith.constant 0 : index
    %c0_6 = arith.constant 0 : index
    %c0_7 = arith.constant 0 : index
    %7 = vector.load %arg4[%c0_5, %c0_6, %c0_7] : memref<2x128x128xbf16, #tpu.memory_space<vmem>>, vector<1x128x128xbf16>
    %8 = vector.shape_cast %7 : vector<1x128x128xbf16> to vector<128x128xbf16>
    %c0_8 = arith.constant 0 : index
    %c0_9 = arith.constant 0 : index
    %c0_10 = arith.constant 0 : index
    %9 = vector.load %arg5[%c0_8, %c0_9, %c0_10] : memref<2x1x128xf32, #tpu.memory_space<vmem>>, vector<1x1x128xf32>
    %10 = vector.shape_cast %9 : vector<1x1x128xf32> to vector<1x128xf32>
    %11 = arith.truncf %6 : vector<8x128xf32> to vector<8x128xbf16>
    %cst_11 = arith.constant dense<0.000000e+00> : vector<8x128xf32>
    %12 = tpu.matmul %11, %8, %cst_11 {dimension_numbers = #tpu.dot_dimension_numbers<[1], [0], [0], [1], [0, 0, 1, 1], [], []>} : vector<8x128xbf16>, vector<128x128xbf16>, vector<8x128xf32> -> vector<8x128xf32>
    %13 = vector.broadcast %10 : vector<1x128xf32> to vector<8x128xf32>
    %14 = arith.addf %12, %13 : vector<8x128xf32>
    %cst_12 = arith.constant 0.000000e+00 : f32
    %15 = vector.broadcast %cst_12 : f32 to vector<8x128xf32>
    %16 = arith.maximumf %14, %15 : vector<8x128xf32>
    %c1 = arith.constant 1 : index
    %c0_13 = arith.constant 0 : index
    %c0_14 = arith.constant 0 : index
    %17 = vector.load %arg4[%c1, %c0_13, %c0_14] : memref<2x128x128xbf16, #tpu.memory_space<vmem>>, vector<1x128x128xbf16>
    %18 = vector.shape_cast %17 : vector<1x128x128xbf16> to vector<128x128xbf16>
    %c1_15 = arith.constant 1 : index
    %c0_16 = arith.constant 0 : index
    %c0_17 = arith.constant 0 : index
    %19 = vector.load %arg5[%c1_15, %c0_16, %c0_17] : memref<2x1x128xf32, #tpu.memory_space<vmem>>, vector<1x1x128xf32>
    %20 = vector.shape_cast %19 : vector<1x1x128xf32> to vector<1x128xf32>
    %21 = arith.truncf %16 : vector<8x128xf32> to vector<8x128xbf16>
    %cst_18 = arith.constant dense<0.000000e+00> : vector<8x128xf32>
    %22 = tpu.matmul %21, %18, %cst_18 {dimension_numbers = #tpu.dot_dimension_numbers<[1], [0], [0], [1], [0, 0, 1, 1], [], []>} : vector<8x128xbf16>, vector<128x128xbf16>, vector<8x128xf32> -> vector<8x128xf32>
    %23 = vector.broadcast %20 : vector<1x128xf32> to vector<8x128xf32>
    %24 = arith.addf %22, %23 : vector<8x128xf32>
    %cst_19 = arith.constant 0.000000e+00 : f32
    %25 = vector.broadcast %cst_19 : f32 to vector<8x128xf32>
    %26 = arith.maximumf %24, %25 : vector<8x128xf32>
    %c0_20 = arith.constant 0 : index
    %c0_21 = arith.constant 0 : index
    %27 = vector.load %arg6[%c0_20, %c0_21] : memref<1x128xf32, #tpu.memory_space<vmem>>, vector<1x128xf32>
    %28 = vector.broadcast %27 : vector<1x128xf32> to vector<8x128xf32>
    %29 = arith.mulf %26, %28 : vector<8x128xf32>
    %cst_22 = arith.constant dense<0.000000e+00> : vector<8xf32>
    %30 = vector.multi_reduction <add>, %29, %cst_22 [1] : vector<8x128xf32> to vector<8xf32>
    %31 = vector.shape_cast %30 : vector<8xf32> to vector<8x1xf32>
    %c0_23 = arith.constant 0 : index
    %c0_24 = arith.constant 0 : index
    %32 = vector.load %arg7[%c0_23, %c0_24] : memref<1x1xf32, #tpu.memory_space<vmem>>, vector<1x1xf32>
    %33 = vector.broadcast %32 : vector<1x1xf32> to vector<8x1xf32>
    %34 = arith.addf %31, %33 : vector<8x1xf32>
    %c0_25 = arith.constant 0 : index
    %c0_26 = arith.constant 0 : index
    %35 = vector.load %arg8[%c0_25, %c0_26] : memref<8x1xf32, #tpu.memory_space<vmem>>, vector<8x1xf32>
    tpu.vector_store %arg8[%c0_25, %c0_26], %34 {strides = array<i32>} : memref<8x1xf32, #tpu.memory_space<vmem>>, vector<8x1xf32>,
    return
  }
  func.func @transform_0(%arg0: i32) -> (i32, i32) {
    %c0_i32 = arith.constant 0 : i32
    %c0_i32_0 = arith.constant 0 : i32
    return %arg0, %c0_i32 : i32, i32
  }
  func.func @transform_1(%arg0: i32) -> (i32, i32) {
    %c0_i32 = arith.constant 0 : i32
    %c0_i32_0 = arith.constant 0 : i32
    %c0_i32_1 = arith.constant 0 : i32
    return %c0_i32, %c0_i32_0 : i32, i32
  }
  func.func @transform_2(%arg0: i32) -> (i32, i32) {
    %c0_i32 = arith.constant 0 : i32
    %c0_i32_0 = arith.constant 0 : i32
    %c0_i32_1 = arith.constant 0 : i32
    return %c0_i32, %c0_i32_0 : i32, i32
  }
  func.func @transform_3(%arg0: i32) -> (i32, i32, i32) {
    %c0_i32 = arith.constant 0 : i32
    %c0_i32_0 = arith.constant 0 : i32
    %c0_i32_1 = arith.constant 0 : i32
    %c0_i32_2 = arith.constant 0 : i32
    return %c0_i32, %c0_i32_0, %c0_i32_1 : i32, i32, i32
  }
  func.func @transform_4(%arg0: i32) -> (i32, i32, i32) {
    %c0_i32 = arith.constant 0 : i32
    %c0_i32_0 = arith.constant 0 : i32
    %c0_i32_1 = arith.constant 0 : i32
    %c0_i32_2 = arith.constant 0 : i32
    return %c0_i32, %c0_i32_0, %c0_i32_1 : i32, i32, i32
  }
  func.func @transform_5(%arg0: i32) -> (i32, i32) {
    %c0_i32 = arith.constant 0 : i32
    %c0_i32_0 = arith.constant 0 : i32
    %c0_i32_1 = arith.constant 0 : i32
    return %c0_i32, %c0_i32_0 : i32, i32
  }
  func.func @transform_6(%arg0: i32) -> (i32, i32) {
    %c0_i32 = arith.constant 0 : i32
    %c0_i32_0 = arith.constant 0 : i32
    %c0_i32_1 = arith.constant 0 : i32
    return %c0_i32, %c0_i32_0 : i32, i32
  }
  func.func @transform_7(%arg0: i32) -> (i32, i32) {
    %c0_i32 = arith.constant 0 : i32
    %c0_i32_0 = arith.constant 0 : i32
    return %arg0, %c0_i32 : i32, i32
  }
}

module attributes {stable_mosaic.version = 11 : i64} {
  func.func @_net_kernel(%arg0: i32, %arg1: memref<8x32xf32, #tpu.memory_space<vmem>>, %arg2: memref<32x128xbf16, #tpu.memory_space<vmem>>, %arg3: memref<1x128xf32, #tpu.memory_space<vmem>>, %arg4: memref<2x128x128xbf16, #tpu.memory_space<vmem>>, %arg5: memref<2x1x128xf32, #tpu.memory_space<vmem>>, %arg6: memref<1x128xf32, #tpu.memory_space<vmem>>, %arg7: memref<1x1xf32, #tpu.memory_space<vmem>>, %arg8: memref<8x1xf32, #tpu.memory_space<vmem>>) attributes {dimension_semantics = [#tpu.dimension_semantics<parallel>], iteration_bounds = array<i64: 1>, scalar_prefetch = 0 : i64, scratch_operands = 0 : i64, tpu.core_type = #tpu.core_type<tc>, window_params = [{transform_indices = @transform_0, window_bounds = array<i64: 8, 32>}, {pipeline_mode = #tpu.pipeline_mode<synchronous>, transform_indices = @transform_1, window_bounds = array<i64: 32, 128>}, {pipeline_mode = #tpu.pipeline_mode<synchronous>, transform_indices = @transform_2, window_bounds = array<i64: 1, 128>}, {pipeline_mode = #tpu.pipeline_mode<synchronous>, transform_indices = @transform_3, window_bounds = array<i64: 2, 128, 128>}, {pipeline_mode = #tpu.pipeline_mode<synchronous>, transform_indices = @transform_4, window_bounds = array<i64: 2, 1, 128>}, {pipeline_mode = #tpu.pipeline_mode<synchronous>, transform_indices = @transform_5, window_bounds = array<i64: 1, 128>}, {pipeline_mode = #tpu.pipeline_mode<synchronous>, transform_indices = @transform_6, window_bounds = array<i64: 1, 1>}, {transform_indices = @transform_7, window_bounds = array<i64: 8, 1>}]} {
    %c0 = arith.constant 0 : index
    %c0_0 = arith.constant 0 : index
    %0 = vector.load %arg1[%c0, %c0_0] : memref<8x32xf32, #tpu.memory_space<vmem>>, vector<8x32xf32>
    %1 = arith.truncf %0 : vector<8x32xf32> to vector<8x32xbf16>
    %c0_1 = arith.constant 0 : index
    %c0_2 = arith.constant 0 : index
    %2 = vector.load %arg2[%c0_1, %c0_2] : memref<32x128xbf16, #tpu.memory_space<vmem>>, vector<32x128xbf16>
    %cst = arith.constant dense<0.000000e+00> : vector<8x128xf32>
    %3 = tpu.matmul %1, %2, %cst {dimension_numbers = #tpu.dot_dimension_numbers<[1], [0], [0], [1], [0, 0, 1, 1], [], []>} : vector<8x32xbf16>, vector<32x128xbf16>, vector<8x128xf32> -> vector<8x128xf32>
    %c0_3 = arith.constant 0 : index
    %c0_4 = arith.constant 0 : index
    %4 = vector.load %arg3[%c0_3, %c0_4] : memref<1x128xf32, #tpu.memory_space<vmem>>, vector<1x128xf32>
    %5 = vector.broadcast %4 : vector<1x128xf32> to vector<8x128xf32>
    %6 = arith.addf %3, %5 : vector<8x128xf32>
    %c0_5 = arith.constant 0 : index
    %c0_6 = arith.constant 0 : index
    %c0_7 = arith.constant 0 : index
    %7 = vector.load %arg4[%c0_5, %c0_6, %c0_7] : memref<2x128x128xbf16, #tpu.memory_space<vmem>>, vector<1x128x128xbf16>
    %8 = vector.shape_cast %7 : vector<1x128x128xbf16> to vector<128x128xbf16>
    %c0_8 = arith.constant 0 : index
    %c0_9 = arith.constant 0 : index
    %c0_10 = arith.constant 0 : index
    %9 = vector.load %arg5[%c0_8, %c0_9, %c0_10] : memref<2x1x128xf32, #tpu.memory_space<vmem>>, vector<1x1x128xf32>
    %10 = vector.shape_cast %9 : vector<1x1x128xf32> to vector<1x128xf32>
    %11 = arith.truncf %6 : vector<8x128xf32> to vector<8x128xbf16>
    %cst_11 = arith.constant dense<0.000000e+00> : vector<8x128xf32>
    %12 = tpu.matmul %11, %8, %cst_11 {dimension_numbers = #tpu.dot_dimension_numbers<[1], [0], [0], [1], [0, 0, 1, 1], [], []>} : vector<8x128xbf16>, vector<128x128xbf16>, vector<8x128xf32> -> vector<8x128xf32>
    %13 = vector.broadcast %10 : vector<1x128xf32> to vector<8x128xf32>
    %14 = arith.addf %12, %13 : vector<8x128xf32>
    %cst_12 = arith.constant 0.000000e+00 : f32
    %15 = vector.broadcast %cst_12 : f32 to vector<8x128xf32>
    %16 = arith.maximumf %14, %15 : vector<8x128xf32>
    %c1 = arith.constant 1 : index
    %c0_13 = arith.constant 0 : index
    %c0_14 = arith.constant 0 : index
    %17 = vector.load %arg4[%c1, %c0_13, %c0_14] : memref<2x128x128xbf16, #tpu.memory_space<vmem>>, vector<1x128x128xbf16>
    %18 = vector.shape_cast %17 : vector<1x128x128xbf16> to vector<128x128xbf16>
    %c1_15 = arith.constant 1 : index
    %c0_16 = arith.constant 0 : index
    %c0_17 = arith.constant 0 : index
    %19 = vector.load %arg5[%c1_15, %c0_16, %c0_17] : memref<2x1x128xf32, #tpu.memory_space<vmem>>, vector<1x1x128xf32>
    %20 = vector.shape_cast %19 : vector<1x1x128xf32> to vector<1x128xf32>
    %21 = arith.truncf %16 : vector<8x128xf32> to vector<8x128xbf16>
    %cst_18 = arith.constant dense<0.000000e+00> : vector<8x128xf32>
    %22 = tpu.matmul %21, %18, %cst_18 {dimension_numbers = #tpu.dot_dimension_numbers<[1], [0], [0], [1], [0, 0, 1, 1], [], []>} : vector<8x128xbf16>, vector<128x128xbf16>, vector<8x128xf32> -> vector<8x128xf32>
    %23 = vector.broadcast %20 : vector<1x128xf32> to vector<8x128xf32>
    %24 = arith.addf %22, %23 : vector<8x128xf32>
    %cst_19 = arith.constant 0.000000e+00 : f32
    %25 = vector.broadcast %cst_19 : f32 to vector<8x128xf32>
    %26 = arith.maximumf %24, %25 : vector<8x128xf32>
    %c0_20 = arith.constant 0 : index
    %c0_21 = arith.constant 0 : index
    %27 = vector.load %arg6[%c0_20, %c0_21] : memref<1x128xf32, #tpu.memory_space<vmem>>, vector<1x128xf32>
    %28 = vector.broadcast %27 : vector<1x128xf32> to vector<8x128xf32>
    %29 = arith.mulf %26, %28 : vector<8x128xf32>
    %cst_22 = arith.constant dense<0.000000e+00> : vector<8xf32>
    %30 = vector.multi_reduction <add>, %29, %cst_22 [1] : vector<8x128xf32> to vector<8xf32>
    %31 = vector.shape_cast %30 : vector<8xf32> to vector<8x1xf32>
    %c0_23 = arith.constant 0 : index
    %c0_24 = arith.constant 0 : index
    %32 = vector.load %arg7[%c0_23, %c0_24] : memref<1x1xf32, #tpu.memory_space<vmem>>, vector<1x1xf32>
    %33 = vector.broadcast %32 : vector<1x1xf32> to vector<8x1xf32>
    %34 = arith.addf %31, %33 : vector<8x1xf32>
    %c0_25 = arith.constant 0 : index
    %c0_26 = arith.constant 0 : index
    %35 = vector.load %arg8[%c0_25, %c0_26] : memref<8x1xf32, #tpu.memory_space<vmem>>, vector<8x1xf32>
    tpu.vector_store %arg8[%c0_25, %c0_26], %34 {strides = array<i32>} : memref<8x1xf32, #tpu.memory_space<vmem>>, vector<8x1xf32>,
    return
  }
  func.func @transform_0(%arg0: i32) -> (i32, i32) {
    %c0_i32 = arith.constant 0 : i32
    %c0_i32_0 = arith.constant 0 : i32
    return %arg0, %c0_i32 : i32, i32
  }
  func.func @transform_1(%arg0: i32) -> (i32, i32) {
    %c0_i32 = arith.constant 0 : i32
    %c0_i32_0 = arith.constant 0 : i32
    %c0_i32_1 = arith.constant 0 : i32
    return %c0_i32, %c0_i32_0 : i32, i32
  }
  func.func @transform_2(%arg0: i32) -> (i32, i32) {
    %c0_i32 = arith.constant 0 : i32
    %c0_i32_0 = arith.constant 0 : i32
    %c0_i32_1 = arith.constant 0 : i32
    return %c0_i32, %c0_i32_0 : i32, i32
  }
  func.func @transform_3(%arg0: i32) -> (i32, i32, i32) {
    %c0_i32 = arith.constant 0 : i32
    %c0_i32_0 = arith.constant 0 : i32
    %c0_i32_1 = arith.constant 0 : i32
    %c0_i32_2 = arith.constant 0 : i32
    return %c0_i32, %c0_i32_0, %c0_i32_1 : i32, i32, i32
  }
  func.func @transform_4(%arg0: i32) -> (i32, i32, i32) {
    %c0_i32 = arith.constant 0 : i32
    %c0_i32_0 = arith.constant 0 : i32
    %c0_i32_1 = arith.constant 0 : i32
    %c0_i32_2 = arith.constant 0 : i32
    return %c0_i32, %c0_i32_0, %c0_i32_1 : i32, i32, i32
  }
  func.func @transform_5(%arg0: i32) -> (i32, i32) {
    %c0_i32 = arith.constant 0 : i32
    %c0_i32_0 = arith.constant 0 : i32
    %c0_i32_1 = arith.constant 0 : i32
    return %c0_i32, %c0_i32_0 : i32, i32
  }
  func.func @transform_6(%arg0: i32) -> (i32, i32) {
    %c0_i32 = arith.constant 0 : i32
    %c0_i32_0 = arith.constant 0 : i32
    %c0_i32_1 = arith.constant 0 : i32
    return %c0_i32, %c0_i32_0 : i32, i32
  }
  func.func @transform_7(%arg0: i32) -> (i32, i32) {
    %c0_i32 = arith.constant 0 : i32
    %c0_i32_0 = arith.constant 0 : i32
    return %arg0, %c0_i32 : i32, i32
  }
}

</mosaic_0001>

<llo_original>
// kernel: tpu_custom_call.1
$region0: #{tpu_custom_call.1}
  #allocation0 [shape = 'u32[]', space=smem, size = 0x4, offset = 0x4, fixed_abs, tag = 'smem constant byte address 0x4 - core index']
  #allocation1 [shape = 'u32[72,128]{1,0:T(1,128)}', space=vmem, size = 0x9000, scoped, tag = 'internal scratch']
  #allocation2 [shape = 'f32[1,1]{1,0:T(1,128)S(1)}', space=vmem, size = 0x200, scoped, tag = 'scoped memory for tpu_custom_call.1']
  %s0 = inlined_call_operand.hbm [shape: f32[8,32], index: 0, kind: input, shape index: {}]
  %s1 = inlined_call_operand.hbm [shape: bf16[32,128], index: 1, kind: input, shape index: {}]
  %s2 = inlined_call_operand.vmem [shape: f32[1,128], index: 2, kind: input, shape index: {}]
  %s3 = inlined_call_operand.hbm [shape: bf16[2,128,128], index: 3, kind: input, shape index: {}]
  %s4 = inlined_call_operand.vmem [shape: f32[2,1,128], index: 4, kind: input, shape index: {}]
  %s5 = inlined_call_operand.vmem [shape: f32[1,128], index: 5, kind: input, shape index: {}]
  %s6 = inlined_call_operand.<no memory space> [shape: f32[1,1], index: 6, kind: input, shape index: {}]
  %s7 = inlined_call_operand.vmem [shape: f32[8,1], index: 7, kind: output, shape index: {}]
  %s8 = sld [smem:[#allocation0]]
  $region50: #{tpu_custom_call.1} parent=0
    _
  %s10 = ssub.s32 1, %s8
  %s11 = scalar_select 0, %s10, %s8
  %v12 = vstv %s6
  %13 = vst [vmem:[#allocation2] sm:$0x1] %v12
  $region1: #{tpu_custom_call.1} parent=0
    #allocation3 [shape = 'u8[4096]{0}', space=vmem, size = 0x1000, scoped, tag = 'input window, operand 0, single buffered']
    #allocation4 [shape = 's32[1]{0}', space=sflag, size = 0x4, scoped, tag = 'scoped memory for tpu_custom_call.1']
    #allocation5 [shape = 'u8[8192]{0}', space=vmem, size = 0x2000, scoped, tag = 'input window, operand 1, single buffered']
    #allocation6 [shape = 's32[1]{0}', space=sflag, size = 0x4, scoped, tag = 'scoped memory for tpu_custom_call.1']
    #allocation7 [shape = 'u8[65536]{0}', space=vmem, size = 0x10000, scoped, tag = 'input window, operand 3, single buffered']
    %14 = vsyncpa [#allocation4], 0
    %15 = vsyncpa [#allocation6], 0
    // Predicated region
    $region2: #{tpu_custom_call.1} parent=1 // pred_check
      _
    $region3: #{tpu_custom_call.1} parent=1 // pred_check_branch
      %17 = sbr.rel (0) target = $region5
    $region4: #{tpu_custom_call.1} parent=1 // pred_region
      %19 = vsyncadd [#allocation4], 0
      %s21 = sshll.u32 %s0, 4
      %s22 = int_to_ptr.hbm [resolvable:$true] %s21
      %s23 = sshll.u32 [#allocation3], 4
      %s24 = int_to_ptr.vmem [resolvable:$true] %s23
      %26 = dma.hbm_to_vmem [thread:$0]  %s22, 128, %s24, [#allocation4]
    $region5: #{tpu_custom_call.1} parent=1 // pred_fallthru
      _
    // Predicated region
    $region6: #{tpu_custom_call.1} parent=1 // pred_check
      _
    $region7: #{tpu_custom_call.1} parent=1 // pred_check_branch
      %28 = sbr.rel (0) target = $region9
    $region8: #{tpu_custom_call.1} parent=1 // pred_region
      %30 = vsyncadd [#allocation6], 0
      %s31 = sshll.u32 %s1, 4
      %s32 = int_to_ptr.hbm [resolvable:$true] %s31
      %s33 = sshll.u32 [#allocation5], 4
      %s34 = int_to_ptr.vmem [resolvable:$true] %s33
      %39 = dma.hbm_to_vmem [thread:$0]  %s32, 256, %s34, [#allocation6], 64, 64, 4
    $region9: #{tpu_custom_call.1} parent=1 // pred_fallthru
      _
    // Predicated region
    $region10: #{tpu_custom_call.1} parent=1 // pred_check
      _
    $region11: #{tpu_custom_call.1} parent=1 // pred_check_branch
      %41 = sbr.rel (0) target = $region13
    $region12: #{tpu_custom_call.1} parent=1 // pred_region
      _
    $region13: #{tpu_custom_call.1} parent=1 // pred_fallthru
      _
    // Predicated region
    $region14: #{tpu_custom_call.1} parent=1 // pred_check
      _
    $region15: #{tpu_custom_call.1} parent=1 // pred_check_branch
      %43 = sbr.rel (0) target = $region17
    $region16: #{tpu_custom_call.1} parent=1 // pred_region
      %45 = vsyncadd [#allocation6], 0
      %s46 = sshll.u32 %s3, 4
      %s47 = int_to_ptr.hbm [resolvable:$true] %s46
      %s48 = sshll.u32 [#allocation7], 4
      %s49 = int_to_ptr.vmem [resolvable:$true] %s48
      %54 = dma.hbm_to_vmem [thread:$0]  %s47, 2048, %s49, [#allocation6], 64, 64, 4
    $region17: #{tpu_custom_call.1} parent=1 // pred_fallthru
      _
    // Predicated region
    $region18: #{tpu_custom_call.1} parent=1 // pred_check
      _
    $region19: #{tpu_custom_call.1} parent=1 // pred_check_branch
      %56 = sbr.rel (0) target = $region21
    $region20: #{tpu_custom_call.1} parent=1 // pred_region
      _
    $region21: #{tpu_custom_call.1} parent=1 // pred_fallthru
      _
    // Predicated region
    $region22: #{tpu_custom_call.1} parent=1 // pred_check
      _
    $region23: #{tpu_custom_call.1} parent=1 // pred_check_branch
      %58 = sbr.rel (0) target = $region25
    $region24: #{tpu_custom_call.1} parent=1 // pred_region
      _
    $region25: #{tpu_custom_call.1} parent=1 // pred_fallthru
      _
    // Predicated region
    $region26: #{tpu_custom_call.1} parent=1 // pred_check
      _
    $region27: #{tpu_custom_call.1} parent=1 // pred_check_branch
      %60 = sbr.rel (0) target = $region29
    $region28: #{tpu_custom_call.1} parent=1 // pred_region
      _
    $region29: #{tpu_custom_call.1} parent=1 // pred_fallthru
      _
    // Predicated region
    $region30: #{tpu_custom_call.1} parent=1 // pred_check
      _
    $region31: #{tpu_custom_call.1} parent=1 // pred_check_branch
      %62 = sbr.rel (0) target = $region33
    $region32: #{tpu_custom_call.1} parent=1 // pred_region
      %64 = dma.done [#allocation4], 128
    $region33: #{tpu_custom_call.1} parent=1 // pred_fallthru
      _
    // Predicated region
    $region34: #{tpu_custom_call.1} parent=1 // pred_check
      _
    $region35: #{tpu_custom_call.1} parent=1 // pred_check_branch
      %66 = sbr.rel (0) target = $region37
    $region36: #{tpu_custom_call.1} parent=1 // pred_region
      %68 = dma.done [#allocation6], 256
    $region37: #{tpu_custom_call.1} parent=1 // pred_fallthru
      _
    // Predicated region
    $region38: #{tpu_custom_call.1} parent=1 // pred_check
      _
    $region39: #{tpu_custom_call.1} parent=1 // pred_check_branch
      %70 = sbr.rel (0) target = $region41
    $region40: #{tpu_custom_call.1} parent=1 // pred_region
      %72 = dma.done [#allocation6], 2048
    $region41: #{tpu_custom_call.1} parent=1 // pred_fallthru
      _
    %v74 = vld [vmem:[#allocation3] sm:$0xff]
    %v75 = vpack.c.bf16 %v74, %v74
    %v76 = vld [vmem:[#allocation5] sm:$0xf]
    %v77 = vld [vmem:[#allocation5 + $0x4] sm:$0xf]
    %v78 = vld [vmem:[#allocation5 + $0x8] sm:$0xf]
    %v79 = vld [vmem:[#allocation5 + $0xc] sm:$0xf]
    %v80 = vld [vmem:[%s2] sm:$0x1]
    %v82 = vperm.slane %v80, 0
    %v88 = vunpack.c.l.b16 %v76
    %v89 = vunpack.c.l.b16 %v77
    %v90 = vunpack.c.l.b16 %v78
    %v91 = vunpack.c.l.b16 %v79
    %v92 = vpack.c.b16 %v89, %v88
    %v93 = vpack.c.b16 %v91, %v90
    %vm96 = vcmask 261120
    %v98 = vsel %vm96, %v75, 0
    %100 = vmatpush.bf16.msra.mxu0 0
    %101 = vmatpush.bf16.msra.mxu0 0
    %102 = vmatpush.bf16.msra.mxu0 0
    %103 = vmatpush.bf16.msra.mxu0 0
    %104 = vmatpush.bf16.msra.mxu0 0
    %105 = vmatpush.bf16.msra.mxu0 0
    %106 = vmatpush.bf16.msra.mxu0 %v93
    %107 = vmatpush.bf16.msra.mxu0 %v92
    %108 = vmatmul.bf16.gmra.mxu0 %v98
    %v109 = vpop.f32.mrf.mxu0
    %v110 = vadd.f32 %v82, %v109
    %v111 = vpop.f32.mrf.mxu0
    %112 = vdwg.mxu0
    %v113 = vld [vmem:[#allocation7] sm:$0xf]
    %v114 = vld [vmem:[#allocation7 + $0x4] sm:$0xf]
    %v115 = vld [vmem:[#allocation7 + $0x8] sm:$0xf]
    %v116 = vld [vmem:[#allocation7 + $0xc] sm:$0xf]
    %v117 = vld [vmem:[#allocation7 + $0x10] sm:$0xf]
    %v118 = vld [vmem:[#allocation7 + $0x14] sm:$0xf]
    %v119 = vld [vmem:[#allocation7 + $0x18] sm:$0xf]
    %v120 = vld [vmem:[#allocation7 + $0x1c] sm:$0xf]
    %v121 = vld [vmem:[#allocation7 + $0x20] sm:$0xf]
    %v122 = vld [vmem:[#allocation7 + $0x24] sm:$0xf]
    %v123 = vld [vmem:[#allocation7 + $0x28] sm:$0xf]
    %v124 = vld [vmem:[#allocation7 + $0x2c] sm:$0xf]
    %v125 = vld [vmem:[#allocation7 + $0x30] sm:$0xf]
    %v126 = vld [vmem:[#allocation7 + $0x34] sm:$0xf]
    %v127 = vld [vmem:[#allocation7 + $0x38] sm:$0xf]
    %v128 = vld [vmem:[#allocation7 + $0x3c] sm:$0xf]
    %v129 = vld [vmem:[%s4] sm:$0x1]
    %v130 = vpack.c.bf16 %v110, %v110
    %v132 = vperm.slane %v129, 0
    %v150 = vunpack.c.l.b16 %v113
    %v151 = vunpack.c.l.b16 %v114
    %v152 = vunpack.c.l.b16 %v115
    %v153 = vunpack.c.l.b16 %v116
    %v154 = vunpack.c.l.b16 %v117
    %v155 = vunpack.c.l.b16 %v118
    %v156 = vunpack.c.l.b16 %v119
    %v157 = vunpack.c.l.b16 %v120
    %v158 = vunpack.c.l.b16 %v121
    %v159 = vunpack.c.l.b16 %v122
    %v160 = vunpack.c.l.b16 %v123
    %v161 = vunpack.c.l.b16 %v124
    %v162 = vunpack.c.l.b16 %v125
    %v163 = vunpack.c.l.b16 %v126
    %v164 = vunpack.c.l.b16 %v127
    %v165 = vunpack.c.l.b16 %v128
    %v166 = vpack.c.b16 %v151, %v150
    %v167 = vpack.c.b16 %v153, %v152
    %v168 = vpack.c.b16 %v155, %v154
    %v169 = vpack.c.b16 %v157, %v156
    %v170 = vpack.c.b16 %v159, %v158
    %v171 = vpack.c.b16 %v161, %v160
    %v172 = vpack.c.b16 %v163, %v162
    %v173 = vpack.c.b16 %v165, %v164
    %182 = vmatpush.bf16.msra.mxu0 %v173
    %183 = vmatpush.bf16.msra.mxu0 %v172
    %184 = vmatpush.bf16.msra.mxu0 %v171
    %185 = vmatpush.bf16.msra.mxu0 %v170
    %186 = vmatpush.bf16.msra.mxu0 %v169
    %187 = vmatpush.bf16.msra.mxu0 %v168
    %188 = vmatpush.bf16.msra.mxu0 %v167
    %189 = vmatpush.bf16.msra.mxu0 %v166
    %190 = vmatmul.bf16.gmra.mxu0 %v130
    %v191 = vpop.f32.mrf.mxu0
    %v192 = vadd.f32 %v132, %v191
    %v193 = vpop.f32.mrf.mxu0
    %194 = vdwg.mxu0
    %v195 = vmax.f32 %v192, 0.0
    %s196 = scalar_lea.vmem [#allocation7], 64
    %v197 = vld [vmem:[%s196] sm:$0xf]
    %v198 = vld [vmem:[%s196 + $0x4] sm:$0xf]
    %v199 = vld [vmem:[%s196 + $0x8] sm:$0xf]
    %v200 = vld [vmem:[%s196 + $0xc] sm:$0xf]
    %v201 = vld [vmem:[%s196 + $0x10] sm:$0xf]
    %v202 = vld [vmem:[%s196 + $0x14] sm:$0xf]
    %v203 = vld [vmem:[%s196 + $0x18] sm:$0xf]
    %v204 = vld [vmem:[%s196 + $0x1c] sm:$0xf]
    %v205 = vld [vmem:[%s196 + $0x20] sm:$0xf]
    %v206 = vld [vmem:[%s196 + $0x24] sm:$0xf]
    %v207 = vld [vmem:[%s196 + $0x28] sm:$0xf]
    %v208 = vld [vmem:[%s196 + $0x2c] sm:$0xf]
    %v209 = vld [vmem:[%s196 + $0x30] sm:$0xf]
    %v210 = vld [vmem:[%s196 + $0x34] sm:$0xf]
    %v211 = vld [vmem:[%s196 + $0x38] sm:$0xf]
    %v212 = vld [vmem:[%s196 + $0x3c] sm:$0xf]
    %s213 = scalar_lea.vmem %s4, 1
    %v214 = vld [vmem:[%s213] sm:$0x1]
    %v215 = vpack.c.bf16 %v195, %v195
    %v217 = vperm.slane %v214, 0
    %v235 = vunpack.c.l.b16 %v197
    %v236 = vunpack.c.l.b16 %v198
    %v237 = vunpack.c.l.b16 %v199
    %v238 = vunpack.c.l.b16 %v200
    %v239 = vunpack.c.l.b16 %v201
    %v240 = vunpack.c.l.b16 %v202
    %v241 = vunpack.c.l.b16 %v203
    %v242 = vunpack.c.l.b16 %v204
    %v243 = vunpack.c.l.b16 %v205
    %v244 = vunpack.c.l.b16 %v206
    %v245 = vunpack.c.l.b16 %v207
    %v246 = vunpack.c.l.b16 %v208
    %v247 = vunpack.c.l.b16 %v209
    %v248 = vunpack.c.l.b16 %v210
    %v249 = vunpack.c.l.b16 %v211
    %v250 = vunpack.c.l.b16 %v212
    %v251 = vpack.c.b16 %v236, %v235
    %v252 = vpack.c.b16 %v238, %v237
    %v253 = vpack.c.b16 %v240, %v239
    %v254 = vpack.c.b16 %v242, %v241
    %v255 = vpack.c.b16 %v244, %v243
    %v256 = vpack.c.b16 %v246, %v245
    %v257 = vpack.c.b16 %v248, %v247
    %v258 = vpack.c.b16 %v250, %v249
    %267 = vmatpush.bf16.msra.mxu0 %v258
    %268 = vmatpush.bf16.msra.mxu0 %v257
    %269 = vmatpush.bf16.msra.mxu0 %v256
    %270 = vmatpush.bf16.msra.mxu0 %v255
    %271 = vmatpush.bf16.msra.mxu0 %v254
    %272 = vmatpush.bf16.msra.mxu0 %v253
    %273 = vmatpush.bf16.msra.mxu0 %v252
    %274 = vmatpush.bf16.msra.mxu0 %v251
    %275 = vmatmul.bf16.gmra.mxu0 %v215
    %v276 = vpop.f32.mrf.mxu0
    %v277 = vadd.f32 %v217, %v276
    %v278 = vpop.f32.mrf.mxu0
    %279 = vdwg.mxu0
    %v280 = vmax.f32 %v277, 0.0
    %v281 = vld [vmem:[%s5] sm:$0x1]
    %v283 = vperm.slane %v281, 0
    %v285 = vmul.f32 %v280, %v283
    %286 = vadd.xlane.f32.xlu0 %v285
    %v287 = vpop.xlane.xlu0 %286
    %v288 = vld [vmem:[#allocation2] sm:$0x1]
    %v290 = vperm.slane %v288, 0
    %v292 = vadd.f32 %v287, %v290
    %vm293 = vcmask 7168
    %294 = vst.msk [vmem:[%s7] sm:$0xff] %vm293, %v292
    // Predicated region
    $region42: #{tpu_custom_call.1} parent=1 // pred_check
      _
    $region43: #{tpu_custom_call.1} parent=1 // pred_check_branch
      %296 = sbr.rel (0) target = $region45
    $region44: #{tpu_custom_call.1} parent=1 // pred_region
      _
    $region45: #{tpu_custom_call.1} parent=1 // pred_fallthru
      _
    // Predicated region
    $region46: #{tpu_custom_call.1} parent=1 // pred_check
      _
    $region47: #{tpu_custom_call.1} parent=1 // pred_check_branch
      %298 = sbr.rel (0) target = $region49
    $region48: #{tpu_custom_call.1} parent=1 // pred_region
      _
    $region49: #{tpu_custom_call.1} parent=1 // pred_fallthru
      _
    %299 = vsyncpa [#allocation4], 1
    %300 = vsyncpa [#allocation6], 1

// kernel: tpu_custom_call.1
$region0: #{tpu_custom_call.1}
  #allocation0 [shape = 'u32[]', space=smem, size = 0x4, offset = 0x4, fixed_abs, tag = 'smem constant byte address 0x4 - core index']
  #allocation1 [shape = 'u32[72,128]{1,0:T(1,128)}', space=vmem, size = 0x9000, scoped, tag = 'internal scratch']
  #allocation2 [shape = 'f32[1,1]{1,0:T(1,128)S(1)}', space=vmem, size = 0x200, scoped, tag = 'scoped memory for tpu_custom_call.1']
  %s0 = inlined_call_operand.hbm [shape: f32[8,32], index: 0, kind: input, shape index: {}]
  %s1 = inlined_call_operand.hbm [shape: bf16[32,128], index: 1, kind: input, shape index: {}]
  %s2 = inlined_call_operand.vmem [shape: f32[1,128], index: 2, kind: input, shape index: {}]
  %s3 = inlined_call_operand.hbm [shape: bf16[2,128,128], index: 3, kind: input, shape index: {}]
  %s4 = inlined_call_operand.vmem [shape: f32[2,1,128], index: 4, kind: input, shape index: {}]
  %s5 = inlined_call_operand.vmem [shape: f32[1,128], index: 5, kind: input, shape index: {}]
  %s6 = inlined_call_operand.<no memory space> [shape: f32[1,1], index: 6, kind: input, shape index: {}]
  %s7 = inlined_call_operand.vmem [shape: f32[8,1], index: 7, kind: output, shape index: {}]
  %s8 = sld [smem:[#allocation0]]
  $region50: #{tpu_custom_call.1} parent=0
    _
  %s10 = ssub.s32 1, %s8
  %s11 = scalar_select 0, %s10, %s8
  %v12 = vstv %s6
  %13 = vst [vmem:[#allocation2] sm:$0x1] %v12
  $region1: #{tpu_custom_call.1} parent=0
    #allocation3 [shape = 'u8[4096]{0}', space=vmem, size = 0x1000, scoped, tag = 'input window, operand 0, single buffered']
    #allocation4 [shape = 's32[1]{0}', space=sflag, size = 0x4, scoped, tag = 'scoped memory for tpu_custom_call.1']
    #allocation5 [shape = 'u8[8192]{0}', space=vmem, size = 0x2000, scoped, tag = 'input window, operand 1, single buffered']
    #allocation6 [shape = 's32[1]{0}', space=sflag, size = 0x4, scoped, tag = 'scoped memory for tpu_custom_call.1']
    #allocation7 [shape = 'u8[65536]{0}', space=vmem, size = 0x10000, scoped, tag = 'input window, operand 3, single buffered']
    %14 = vsyncpa [#allocation4], 0
    %15 = vsyncpa [#allocation6], 0
    // Predicated region
    $region2: #{tpu_custom_call.1} parent=1 // pred_check
      _
    $region3: #{tpu_custom_call.1} parent=1 // pred_check_branch
      %17 = sbr.rel (0) target = $region5
    $region4: #{tpu_custom_call.1} parent=1 // pred_region
      %19 = vsyncadd [#allocation4], 0
      %s21 = sshll.u32 %s0, 4
      %s22 = int_to_ptr.hbm [resolvable:$true] %s21
      %s23 = sshll.u32 [#allocation3], 4
      %s24 = int_to_ptr.vmem [resolvable:$true] %s23
      %26 = dma.hbm_to_vmem [thread:$0]  %s22, 128, %s24, [#allocation4]
    $region5: #{tpu_custom_call.1} parent=1 // pred_fallthru
      _
    // Predicated region
    $region6: #{tpu_custom_call.1} parent=1 // pred_check
      _
    $region7: #{tpu_custom_call.1} parent=1 // pred_check_branch
      %28 = sbr.rel (0) target = $region9
    $region8: #{tpu_custom_call.1} parent=1 // pred_region
      %30 = vsyncadd [#allocation6], 0
      %s31 = sshll.u32 %s1, 4
      %s32 = int_to_ptr.hbm [resolvable:$true] %s31
      %s33 = sshll.u32 [#allocation5], 4
      %s34 = int_to_ptr.vmem [resolvable:$true] %s33
      %39 = dma.hbm_to_vmem [thread:$0]  %s32, 256, %s34, [#allocation6], 64, 64, 4
    $region9: #{tpu_custom_call.1} parent=1 // pred_fallthru
      _
    // Predicated region
    $region10: #{tpu_custom_call.1} parent=1 // pred_check
      _
    $region11: #{tpu_custom_call.1} parent=1 // pred_check_branch
      %41 = sbr.rel (0) target = $region13
    $region12: #{tpu_custom_call.1} parent=1 // pred_region
      _
    $region13: #{tpu_custom_call.1} parent=1 // pred_fallthru
      _
    // Predicated region
    $region14: #{tpu_custom_call.1} parent=1 // pred_check
      _
    $region15: #{tpu_custom_call.1} parent=1 // pred_check_branch
      %43 = sbr.rel (0) target = $region17
    $region16: #{tpu_custom_call.1} parent=1 // pred_region
      %45 = vsyncadd [#allocation6], 0
      %s46 = sshll.u32 %s3, 4
      %s47 = int_to_ptr.hbm [resolvable:$true] %s46
      %s48 = sshll.u32 [#allocation7], 4
      %s49 = int_to_ptr.vmem [resolvable:$true] %s48
      %54 = dma.hbm_to_vmem [thread:$0]  %s47, 2048, %s49, [#allocation6], 64, 64, 4
    $region17: #{tpu_custom_call.1} parent=1 // pred_fallthru
      _
    // Predicated region
    $region18: #{tpu_custom_call.1} parent=1 // pred_check
      _
    $region19: #{tpu_custom_call.1} parent=1 // pred_check_branch
      %56 = sbr.rel (0) target = $region21
    $region20: #{tpu_custom_call.1} parent=1 // pred_region
      _
    $region21: #{tpu_custom_call.1} parent=1 // pred_fallthru
      _
    // Predicated region
    $region22: #{tpu_custom_call.1} parent=1 // pred_check
      _
    $region23: #{tpu_custom_call.1} parent=1 // pred_check_branch
      %58 = sbr.rel (0) target = $region25
    $region24: #{tpu_custom_call.1} parent=1 // pred_region
      _
    $region25: #{tpu_custom_call.1} parent=1 // pred_fallthru
      _
    // Predicated region
    $region26: #{tpu_custom_call.1} parent=1 // pred_check
      _
    $region27: #{tpu_custom_call.1} parent=1 // pred_check_branch
      %60 = sbr.rel (0) target = $region29
    $region28: #{tpu_custom_call.1} parent=1 // pred_region
      _
    $region29: #{tpu_custom_call.1} parent=1 // pred_fallthru
      _
    // Predicated region
    $region30: #{tpu_custom_call.1} parent=1 // pred_check
      _
    $region31: #{tpu_custom_call.1} parent=1 // pred_check_branch
      %62 = sbr.rel (0) target = $region33
    $region32: #{tpu_custom_call.1} parent=1 // pred_region
      %64 = dma.done [#allocation4], 128
    $region33: #{tpu_custom_call.1} parent=1 // pred_fallthru
      _
    // Predicated region
    $region34: #{tpu_custom_call.1} parent=1 // pred_check
      _
    $region35: #{tpu_custom_call.1} parent=1 // pred_check_branch
      %66 = sbr.rel (0) target = $region37
    $region36: #{tpu_custom_call.1} parent=1 // pred_region
      %68 = dma.done [#allocation6], 256
    $region37: #{tpu_custom_call.1} parent=1 // pred_fallthru
      _
    // Predicated region
    $region38: #{tpu_custom_call.1} parent=1 // pred_check
      _
    $region39: #{tpu_custom_call.1} parent=1 // pred_check_branch
      %70 = sbr.rel (0) target = $region41
    $region40: #{tpu_custom_call.1} parent=1 // pred_region
      %72 = dma.done [#allocation6], 2048
    $region41: #{tpu_custom_call.1} parent=1 // pred_fallthru
      _
    %v74 = vld [vmem:[#allocation3] sm:$0xff]
    %v75 = vpack.c.bf16 %v74, %v74
    %v76 = vld [vmem:[#allocation5] sm:$0xf]
    %v77 = vld [vmem:[#allocation5 + $0x4] sm:$0xf]
    %v78 = vld [vmem:[#allocation5 + $0x8] sm:$0xf]
    %v79 = vld [vmem:[#allocation5 + $0xc] sm:$0xf]
    %v80 = vld [vmem:[%s2] sm:$0x1]
    %v82 = vperm.slane %v80, 0
    %v88 = vunpack.c.l.b16 %v76
    %v89 = vunpack.c.l.b16 %v77
    %v90 = vunpack.c.l.b16 %v78
    %v91 = vunpack.c.l.b16 %v79
    %v92 = vpack.c.b16 %v89, %v88
    %v93 = vpack.c.b16 %v91, %v90
    %vm96 = vcmask 261120
    %v98 = vsel %vm96, %v75, 0
    %100 = vmatpush.bf16.msra.mxu0 0
    %101 = vmatpush.bf16.msra.mxu0 0
    %102 = vmatpush.bf16.msra.mxu0 0
    %103 = vmatpush.bf16.msra.mxu0 0
    %104 = vmatpush.bf16.msra.mxu0 0
    %105 = vmatpush.bf16.msra.mxu0 0
    %106 = vmatpush.bf16.msra.mxu0 %v93
    %107 = vmatpush.bf16.msra.mxu0 %v92
    %108 = vmatmul.bf16.gmra.mxu0 %v98
    %v109 = vpop.f32.mrf.mxu0
    %v110 = vadd.f32 %v82, %v109
    %v111 = vpop.f32.mrf.mxu0
    %112 = vdwg.mxu0
    %v113 = vld [vmem:[#allocation7] sm:$0xf]
    %v114 = vld [vmem:[#allocation7 + $0x4] sm:$0xf]
    %v115 = vld [vmem:[#allocation7 + $0x8] sm:$0xf]
    %v116 = vld [vmem:[#allocation7 + $0xc] sm:$0xf]
    %v117 = vld [vmem:[#allocation7 + $0x10] sm:$0xf]
    %v118 = vld [vmem:[#allocation7 + $0x14] sm:$0xf]
    %v119 = vld [vmem:[#allocation7 + $0x18] sm:$0xf]
    %v120 = vld [vmem:[#allocation7 + $0x1c] sm:$0xf]
    %v121 = vld [vmem:[#allocation7 + $0x20] sm:$0xf]
    %v122 = vld [vmem:[#allocation7 + $0x24] sm:$0xf]
    %v123 = vld [vmem:[#allocation7 + $0x28] sm:$0xf]
    %v124 = vld [vmem:[#allocation7 + $0x2c] sm:$0xf]
    %v125 = vld [vmem:[#allocation7 + $0x30] sm:$0xf]
    %v126 = vld [vmem:[#allocation7 + $0x34] sm:$0xf]
    %v127 = vld [vmem:[#allocation7 + $0x38] sm:$0xf]
    %v128 = vld [vmem:[#allocation7 + $0x3c] sm:$0xf]
    %v129 = vld [vmem:[%s4] sm:$0x1]
    %v130 = vpack.c.bf16 %v110, %v110
    %v132 = vperm.slane %v129, 0
    %v150 = vunpack.c.l.b16 %v113
    %v151 = vunpack.c.l.b16 %v114
    %v152 = vunpack.c.l.b16 %v115
    %v153 = vunpack.c.l.b16 %v116
    %v154 = vunpack.c.l.b16 %v117
    %v155 = vunpack.c.l.b16 %v118
    %v156 = vunpack.c.l.b16 %v119
    %v157 = vunpack.c.l.b16 %v120
    %v158 = vunpack.c.l.b16 %v121
    %v159 = vunpack.c.l.b16 %v122
    %v160 = vunpack.c.l.b16 %v123
    %v161 = vunpack.c.l.b16 %v124
    %v162 = vunpack.c.l.b16 %v125
    %v163 = vunpack.c.l.b16 %v126
    %v164 = vunpack.c.l.b16 %v127
    %v165 = vunpack.c.l.b16 %v128
    %v166 = vpack.c.b16 %v151, %v150
    %v167 = vpack.c.b16 %v153, %v152
    %v168 = vpack.c.b16 %v155, %v154
    %v169 = vpack.c.b16 %v157, %v156
    %v170 = vpack.c.b16 %v159, %v158
    %v171 = vpack.c.b16 %v161, %v160
    %v172 = vpack.c.b16 %v163, %v162
    %v173 = vpack.c.b16 %v165, %v164
    %182 = vmatpush.bf16.msra.mxu0 %v173
    %183 = vmatpush.bf16.msra.mxu0 %v172
    %184 = vmatpush.bf16.msra.mxu0 %v171
    %185 = vmatpush.bf16.msra.mxu0 %v170
    %186 = vmatpush.bf16.msra.mxu0 %v169
    %187 = vmatpush.bf16.msra.mxu0 %v168
    %188 = vmatpush.bf16.msra.mxu0 %v167
    %189 = vmatpush.bf16.msra.mxu0 %v166
    %190 = vmatmul.bf16.gmra.mxu0 %v130
    %v191 = vpop.f32.mrf.mxu0
    %v192 = vadd.f32 %v132, %v191
    %v193 = vpop.f32.mrf.mxu0
    %194 = vdwg.mxu0
    %v195 = vmax.f32 %v192, 0.0
    %s196 = scalar_lea.vmem [#allocation7], 64
    %v197 = vld [vmem:[%s196] sm:$0xf]
    %v198 = vld [vmem:[%s196 + $0x4] sm:$0xf]
    %v199 = vld [vmem:[%s196 + $0x8] sm:$0xf]
    %v200 = vld [vmem:[%s196 + $0xc] sm:$0xf]
    %v201 = vld [vmem:[%s196 + $0x10] sm:$0xf]
    %v202 = vld [vmem:[%s196 + $0x14] sm:$0xf]
    %v203 = vld [vmem:[%s196 + $0x18] sm:$0xf]
    %v204 = vld [vmem:[%s196 + $0x1c] sm:$0xf]
    %v205 = vld [vmem:[%s196 + $0x20] sm:$0xf]
    %v206 = vld [vmem:[%s196 + $0x24] sm:$0xf]
    %v207 = vld [vmem:[%s196 + $0x28] sm:$0xf]
    %v208 = vld [vmem:[%s196 + $0x2c] sm:$0xf]
    %v209 = vld [vmem:[%s196 + $0x30] sm:$0xf]
    %v210 = vld [vmem:[%s196 + $0x34] sm:$0xf]
    %v211 = vld [vmem:[%s196 + $0x38] sm:$0xf]
    %v212 = vld [vmem:[%s196 + $0x3c] sm:$0xf]
    %s213 = scalar_lea.vmem %s4, 1
    %v214 = vld [vmem:[%s213] sm:$0x1]
    %v215 = vpack.c.bf16 %v195, %v195
    %v217 = vperm.slane %v214, 0
    %v235 = vunpack.c.l.b16 %v197
    %v236 = vunpack.c.l.b16 %v198
    %v237 = vunpack.c.l.b16 %v199
    %v238 = vunpack.c.l.b16 %v200
    %v239 = vunpack.c.l.b16 %v201
    %v240 = vunpack.c.l.b16 %v202
    %v241 = vunpack.c.l.b16 %v203
    %v242 = vunpack.c.l.b16 %v204
    %v243 = vunpack.c.l.b16 %v205
    %v244 = vunpack.c.l.b16 %v206
    %v245 = vunpack.c.l.b16 %v207
    %v246 = vunpack.c.l.b16 %v208
    %v247 = vunpack.c.l.b16 %v209
    %v248 = vunpack.c.l.b16 %v210
    %v249 = vunpack.c.l.b16 %v211
    %v250 = vunpack.c.l.b16 %v212
    %v251 = vpack.c.b16 %v236, %v235
    %v252 = vpack.c.b16 %v238, %v237
    %v253 = vpack.c.b16 %v240, %v239
    %v254 = vpack.c.b16 %v242, %v241
    %v255 = vpack.c.b16 %v244, %v243
    %v256 = vpack.c.b16 %v246, %v245
    %v257 = vpack.c.b16 %v248, %v247
    %v258 = vpack.c.b16 %v250, %v249
    %267 = vmatpush.bf16.msra.mxu0 %v258
    %268 = vmatpush.bf16.msra.mxu0 %v257
    %269 = vmatpush.bf16.msra.mxu0 %v256
    %270 = vmatpush.bf16.msra.mxu0 %v255
    %271 = vmatpush.bf16.msra.mxu0 %v254
    %272 = vmatpush.bf16.msra.mxu0 %v253
    %273 = vmatpush.bf16.msra.mxu0 %v252
    %274 = vmatpush.bf16.msra.mxu0 %v251
    %275 = vmatmul.bf16.gmra.mxu0 %v215
    %v276 = vpop.f32.mrf.mxu0
    %v277 = vadd.f32 %v217, %v276
    %v278 = vpop.f32.mrf.mxu0
    %279 = vdwg.mxu0
    %v280 = vmax.f32 %v277, 0.0
    %v281 = vld [vmem:[%s5] sm:$0x1]
    %v283 = vperm.slane %v281, 0
    %v285 = vmul.f32 %v280, %v283
    %286 = vadd.xlane.f32.xlu0 %v285
    %v287 = vpop.xlane.xlu0 %286
    %v288 = vld [vmem:[#allocation2] sm:$0x1]
    %v290 = vperm.slane %v288, 0
    %v292 = vadd.f32 %v287, %v290
    %vm293 = vcmask 7168
    %294 = vst.msk [vmem:[%s7] sm:$0xff] %vm293, %v292
    // Predicated region
    $region42: #{tpu_custom_call.1} parent=1 // pred_check
      _
    $region43: #{tpu_custom_call.1} parent=1 // pred_check_branch
      %296 = sbr.rel (0) target = $region45
    $region44: #{tpu_custom_call.1} parent=1 // pred_region
      _
    $region45: #{tpu_custom_call.1} parent=1 // pred_fallthru
      _
    // Predicated region
    $region46: #{tpu_custom_call.1} parent=1 // pred_check
      _
    $region47: #{tpu_custom_call.1} parent=1 // pred_check_branch
      %298 = sbr.rel (0) target = $region49
    $region48: #{tpu_custom_call.1} parent=1 // pred_region
      _
    $region49: #{tpu_custom_call.1} parent=1 // pred_fallthru
      _
    %299 = vsyncpa [#allocation4], 1
    %300 = vsyncpa [#allocation6], 1

</llo_original>
